<compile_context>
chip_gen: v7x
topology: tpu7x:2x2x1
jax: 0.10.0
libtpu: 0.0.40
codegen_flags: <defaults>
</compile_context>

<pallas_src>
import functools
import math

import jax
import jax.numpy as jnp
import numpy as np
from jax import lax
from jax.experimental import pallas as pl
from jax.experimental.pallas import tpu as pltpu

BN_EPS = 1e-5
LANE = 128


def _round_up(x, m):
    return ((x + m - 1) // m) * m


def _pick_vmem_limit_bytes():
    """~80% of physical VMEM, capped at 110 MiB (per-generation headroom)."""
    try:
        cap = int(pltpu.get_tpu_info().vmem_capacity_bytes)
    except Exception:
        cap = 64 * 1024 * 1024  # conservative fallback (v7x physical)
    return min(int(cap * 0.8), 110 * 1024 * 1024)


def _batchnorm_relu(z, gamma, beta):
    """Training-mode BatchNorm1d (biased var) + ReLU, one pass over z.

    var = E[z^2] - mean^2 (clamped at 0). Padded lanes are exactly 0, so they
    yield mean=var=0 -> output 0 and never pollute the valid columns.
    """
    mu = jnp.mean(z, axis=0, keepdims=True)
    ms = jnp.mean(z * z, axis=0, keepdims=True)
    var = jnp.maximum(ms - mu * mu, 0.0)
    z = (z - mu) * lax.rsqrt(var + BN_EPS) * gamma + beta
    return jnp.maximum(z, 0.0)


def fused_gin_kernel(eps_ref, a_ref, x_hbm_ref, w_ref, vec_ref, o_ref, seed_sem):
    """One grid step == one full GIN layer; o_ref carries h across layers.

    vec_ref rows: 0=b, 1=gamma1, 2=beta1, 3=gamma2, 4=beta2, 5..7=unused.
    """
    l = pl.program_id(0)

    # Seed the carried hidden state straight from HBM into the resident output
    # window (no separate VMEM-resident feature buffer, no vector copy).
    @pl.when(l == 0)
    def _():
        cp = pltpu.make_async_copy(x_hbm_ref, o_ref, seed_sem)
        cp.start()
        cp.wait()

    h = o_ref[...]                                       # [N, Dp] f32, carried

    # Sum-pooling neighbor aggregation on the MXU: bf16 x bf16, f32 accumulate.
    # A holds exact 0/1 values in bf16; h is rounded to bf16 for the matmul.
    agg = jnp.dot(a_ref[...], h.astype(jnp.bfloat16),
                  preferred_element_type=jnp.float32)
    z = (1.0 + eps_ref[l]) * h + agg                     # GINConv (learnable eps)

    # 1-layer MLP (Linear, zero-padded to Dp x Dp): bf16 operands, f32 accum,
    # bias added in f32. BN right after renormalizes the rounding error.
    z = jnp.dot(z.astype(jnp.bfloat16), w_ref[...],
                preferred_element_type=jnp.float32) + vec_ref[0:1, :]

    # ApplyNodeFunc.bn + ReLU, then GIN.batch_norms[i] + ReLU.
    z = _batchnorm_relu(z, vec_ref[1:2, :], vec_ref[2:3, :])
    o_ref[...] = _batchnorm_relu(z, vec_ref[3:4, :], vec_ref[4:5, :])


@functools.partial(jax.jit, static_argnames=("n_hidden",))
def _encoder_pallas(eps, a_bf16, features, w, vecs, *, n_hidden):
    num_layers, dp, _ = w.shape
    n, f = features.shape
    # Zero-pad features to the lane-dense width; padded lanes stay exactly 0
    # through every layer (zero weight rows/cols, zero bias/beta).
    x_pad = jnp.zeros((n, dp), jnp.float32).at[:, :f].set(features)

    out = pl.pallas_call(
        fused_gin_kernel,
        grid=(num_layers,),
        in_specs=[
            pl.BlockSpec(memory_space=pltpu.MemorySpace.SMEM),   # eps[L] scalars
            pl.BlockSpec((n, n), lambda l: (0, 0)),              # A (bf16), VMEM-resident
            pl.BlockSpec(memory_space=pl.ANY),                   # x_pad: HBM only
            pl.BlockSpec((None, dp, dp), lambda l: (l, 0, 0)),   # W_l (bf16, streamed)
            pl.BlockSpec((None, 8, dp), lambda l: (l, 0, 0)),    # packed per-layer vecs
        ],
        out_specs=pl.BlockSpec((n, dp), lambda l: (0, 0)),       # running h, resident
        out_shape=jax.ShapeDtypeStruct((n, dp), jnp.float32),
        scratch_shapes=[pltpu.SemaphoreType.DMA(())],            # seed-DMA semaphore
        input_output_aliases={2: 0},                             # x_pad HBM buf == out
        compiler_params=pltpu.CompilerParams(
            dimension_semantics=("arbitrary",),                  # layer loop is serial
            vmem_limit_bytes=_pick_vmem_limit_bytes()),
    )(eps, a_bf16, x_pad, w, vecs)
    return out[:, :n_hidden]


def init_encoder_params(key, in_feats, n_hidden, n_layers):
    """Deterministic parameter init mirroring the PyTorch module __init__."""
    num_gin_layers = n_layers + 1
    dims_in = [in_feats] + [n_hidden] * (num_gin_layers - 1)
    layers = []
    for din in dims_in:
        key, kw, kb = jax.random.split(key, 3)
        bound = 1.0 / math.sqrt(din)
        layers.append(dict(
            w=jax.random.uniform(kw, (din, n_hidden), jnp.float32, -bound, bound),
            b=jax.random.uniform(kb, (n_hidden,), jnp.float32, -bound, bound),
            eps=jnp.zeros((), jnp.float32),            # learn_eps init 0
            g1=jnp.ones((n_hidden,), jnp.float32),     # BN defaults
            be1=jnp.zeros((n_hidden,), jnp.float32),
            g2=jnp.ones((n_hidden,), jnp.float32),
            be2=jnp.zeros((n_hidden,), jnp.float32),
        ))
    return {"layers": layers}


def pack_params(params, lane_pad=LANE):
    """Zero-pad per-layer params to a lane-dense width and stack over layers.

    Weights are stored bf16 (MXU operand dtype); the five per-layer vectors are
    packed into one (8, Dp) f32 tile per layer so each grid step streams a
    single aligned tile instead of five (1, Dp) blocks.
    """
    layers = params["layers"]
    n_hidden = layers[0]["w"].shape[1]
    widths = [lp["w"].shape[0] for lp in layers] + [n_hidden]
    dp = max(_round_up(max(widths), lane_pad), lane_pad)

    def pad_mat(wm):
        din, dh = wm.shape
        return (jnp.zeros((dp, dp), jnp.bfloat16)
                .at[:din, :dh].set(wm.astype(jnp.bfloat16)))

    def pad_vec(v, fill):
        return jnp.full((dp,), fill, jnp.float32).at[:v.shape[0]].set(v)

    def pack_layer_vecs(lp):
        return jnp.stack([
            pad_vec(lp["b"], 0.0),     # row 0: bias
            pad_vec(lp["g1"], 1.0),    # row 1: BN1 gamma
            pad_vec(lp["be1"], 0.0),   # row 2: BN1 beta
            pad_vec(lp["g2"], 1.0),    # row 3: BN2 gamma
            pad_vec(lp["be2"], 0.0),   # row 4: BN2 beta
            jnp.zeros((dp,), jnp.float32),
            jnp.zeros((dp,), jnp.float32),
            jnp.zeros((dp,), jnp.float32),
        ])

    w = jnp.stack([pad_mat(lp["w"]) for lp in layers])        # [L, Dp, Dp] bf16
    vecs = jnp.stack([pack_layer_vecs(lp) for lp in layers])  # [L, 8, Dp]  f32
    eps = jnp.stack([lp["eps"] for lp in layers])             # [L]         f32
    return dict(w=w, vecs=vecs, eps=eps, n_hidden=int(n_hidden))


def encoder_forward(packed, adjacency_bf16, features, corrupt=False, key=None):
    """Encoder.forward: optional node-feature permutation, then fused GIN."""
    if corrupt:
        perm = jax.random.permutation(key, features.shape[0])
        features = features[perm]
    return _encoder_pallas(packed["eps"], adjacency_bf16, features,
                           packed["w"], packed["vecs"],
                           n_hidden=packed["n_hidden"])


def encoder_forward_ref(params, adjacency, features):
    """Pure-JAX f32 reference for correctness checking."""
    h = features
    for lp in params["layers"]:
        z = (1.0 + lp["eps"]) * h + adjacency @ h
        z = z @ lp["w"] + lp["b"][None, :]
        mu = jnp.mean(z, axis=0, keepdims=True)
        var = jnp.mean(jnp.square(z - mu), axis=0, keepdims=True)
        z = jnp.maximum((z - mu) * lax.rsqrt(var + BN_EPS) * lp["g1"][None, :]
                        + lp["be1"][None, :], 0.0)
        mu2 = jnp.mean(z, axis=0, keepdims=True)
        var2 = jnp.mean(jnp.square(z - mu2), axis=0, keepdims=True)
        z = jnp.maximum((z - mu2) * lax.rsqrt(var2 + BN_EPS) * lp["g2"][None, :]
                        + lp["be2"][None, :], 0.0)
        h = z
    return h


if __name__ == "__main__":
    # Small deterministic problem: 64-node graph, 16 input feats, 32 hidden, 2 layers.
    N, IN_FEATS, N_HIDDEN, N_LAYERS = 64, 16, 32, 2

    key = jax.random.PRNGKey(0)
    k_feat, k_adj, k_params = jax.random.split(key, 3)

    features = jax.random.normal(k_feat, (N, IN_FEATS), jnp.float32)

    # Deterministic random undirected graph without self-loops (dense adjacency).
    adj = (jax.random.uniform(k_adj, (N, N)) < 0.3).astype(jnp.float32)
    adj = jnp.maximum(adj, adj.T)
    adj = adj * (1.0 - jnp.eye(N, dtype=jnp.float32))
    adj_bf16 = adj.astype(jnp.bfloat16)   # 0/1 values are exact in bf16

    params = init_encoder_params(k_params, IN_FEATS, N_HIDDEN, N_LAYERS)
    packed = pack_params(params)

    # TODO(synk): dropout (final_dropout) is defined in GIN.__init__ but never
    # applied in its forward pass, so it is intentionally omitted here.
    out = encoder_forward(packed, adj_bf16, features, corrupt=False)
    out = jax.block_until_ready(out)

    ref = encoder_forward_ref(params, adj, features)
    # Tolerance loosened vs. f32: both the aggregation and the MLP matmuls now
    # run in bf16 (with f32 accumulation) across 3 stacked layers; BatchNorm
    # renormalizes most, but not all, of the rounding error.
    np.testing.assert_allclose(np.asarray(out), np.asarray(ref), rtol=1e-1, atol=1e-1)

    print("KERNEL_OK")
</pallas_src>

<mosaic_0001>
module attributes {stable_mosaic.version = 11 : i64} {
  func.func @fused_gin_kernel(%arg0: i32, %arg1: memref<3xf32, #tpu.memory_space<smem>>, %arg2: memref<64x64xbf16, #tpu.memory_space<vmem>>, %arg3: memref<64x128xf32, #tpu.memory_space<any>>, %arg4: memref<1x128x128xbf16, #tpu.memory_space<vmem>>, %arg5: memref<1x8x128xf32, #tpu.memory_space<vmem>>, %arg6: memref<64x128xf32, #tpu.memory_space<vmem>>, %arg7: memref<!tpu.dma_semaphore, #tpu.memory_space<semaphore_mem>>) attributes {dimension_semantics = [#tpu.dimension_semantics<arbitrary>], iteration_bounds = array<i64: 3>, scalar_prefetch = 0 : i64, scratch_operands = 1 : i64, tpu.core_type = #tpu.core_type<tc>, window_params = [{transform_indices = @transform_0, window_bounds = array<i64: 3>}, {pipeline_mode = #tpu.pipeline_mode<synchronous>, transform_indices = @transform_1, window_bounds = array<i64: 64, 64>}, {}, {transform_indices = @transform_3, window_bounds = array<i64: 1, 128, 128>}, {transform_indices = @transform_4, window_bounds = array<i64: 1, 8, 128>}, {pipeline_mode = #tpu.pipeline_mode<synchronous>, transform_indices = @transform_5, window_bounds = array<i64: 64, 128>}]} {
    %c0_i32 = arith.constant 0 : i32
    %0 = arith.cmpi eq, %arg0, %c0_i32 : i32
    %1 = arith.extui %0 : i1 to i32
    %c0_i32_0 = arith.constant 0 : i32
    %2 = arith.cmpi ne, %1, %c0_i32_0 : i32
    scf.if %2 {
      tpu.enqueue_dma source(%arg3 : memref<64x128xf32, #tpu.memory_space<any>>) target(%arg6 : memref<64x128xf32, #tpu.memory_space<vmem>>) target_semaphore(%arg7 : memref<!tpu.dma_semaphore, #tpu.memory_space<semaphore_mem>>)
      tpu.wait_dma2 semaphore(%arg7 : memref<!tpu.dma_semaphore, #tpu.memory_space<semaphore_mem>>) src(%arg3 : memref<64x128xf32, #tpu.memory_space<any>>) dst(%arg6 : memref<64x128xf32, #tpu.memory_space<vmem>>)
    } else {
    }
    %c0 = arith.constant 0 : index
    %c0_1 = arith.constant 0 : index
    %3 = vector.load %arg6[%c0, %c0_1] : memref<64x128xf32, #tpu.memory_space<vmem>>, vector<64x128xf32>
    %c0_2 = arith.constant 0 : index
    %c0_3 = arith.constant 0 : index
    %4 = vector.load %arg2[%c0_2, %c0_3] : memref<64x64xbf16, #tpu.memory_space<vmem>>, vector<64x64xbf16>
    %5 = arith.truncf %3 : vector<64x128xf32> to vector<64x128xbf16>
    %cst = arith.constant dense<0.000000e+00> : vector<64x128xf32>
    %6 = tpu.matmul %4, %5, %cst {dimension_numbers = #tpu.dot_dimension_numbers<[1], [0], [0], [1], [0, 0, 1, 1], [], []>} : vector<64x64xbf16>, vector<64x128xbf16>, vector<64x128xf32> -> vector<64x128xf32>
    %7 = arith.index_cast %arg0 : i32 to index
    %8 = memref.load %arg1[%7] : memref<3xf32, #tpu.memory_space<smem>>
    %cst_4 = arith.constant 1.000000e+00 : f32
    %9 = arith.addf %cst_4, %8 : f32
    %10 = vector.broadcast %9 : f32 to vector<64x128xf32>
    %11 = arith.mulf %10, %3 : vector<64x128xf32>
    %12 = arith.addf %11, %6 : vector<64x128xf32>
    %13 = arith.truncf %12 : vector<64x128xf32> to vector<64x128xbf16>
    %c0_5 = arith.constant 0 : index
    %c0_6 = arith.constant 0 : index
    %c0_7 = arith.constant 0 : index
    %14 = vector.load %arg4[%c0_5, %c0_6, %c0_7] : memref<1x128x128xbf16, #tpu.memory_space<vmem>>, vector<1x128x128xbf16>
    %15 = vector.shape_cast %14 : vector<1x128x128xbf16> to vector<128x128xbf16>
    %cst_8 = arith.constant dense<0.000000e+00> : vector<64x128xf32>
    %16 = tpu.matmul %13, %15, %cst_8 {dimension_numbers = #tpu.dot_dimension_numbers<[1], [0], [0], [1], [0, 0, 1, 1], [], []>} : vector<64x128xbf16>, vector<128x128xbf16>, vector<64x128xf32> -> vector<64x128xf32>
    %c0_9 = arith.constant 0 : index
    %c0_10 = arith.constant 0 : index
    %c0_11 = arith.constant 0 : index
    %17 = vector.load %arg5[%c0_9, %c0_10, %c0_11] : memref<1x8x128xf32, #tpu.memory_space<vmem>>, vector<1x1x128xf32>
    %18 = vector.shape_cast %17 : vector<1x1x128xf32> to vector<1x128xf32>
    %19 = vector.broadcast %18 : vector<1x128xf32> to vector<64x128xf32>
    %20 = arith.addf %16, %19 : vector<64x128xf32>
    %c0_12 = arith.constant 0 : index
    %c1 = arith.constant 1 : index
    %c0_13 = arith.constant 0 : index
    %21 = vector.load %arg5[%c0_12, %c1, %c0_13] : memref<1x8x128xf32, #tpu.memory_space<vmem>>, vector<1x1x128xf32>
    %22 = vector.shape_cast %21 : vector<1x1x128xf32> to vector<1x128xf32>
    %c0_14 = arith.constant 0 : index
    %c2 = arith.constant 2 : index
    %c0_15 = arith.constant 0 : index
    %23 = vector.load %arg5[%c0_14, %c2, %c0_15] : memref<1x8x128xf32, #tpu.memory_space<vmem>>, vector<1x1x128xf32>
    %24 = vector.shape_cast %23 : vector<1x1x128xf32> to vector<1x128xf32>
    %cst_16 = arith.constant dense<0.000000e+00> : vector<128xf32>
    %25 = vector.multi_reduction <add>, %20, %cst_16 [0] : vector<64x128xf32> to vector<128xf32>
    %26 = vector.shape_cast %25 : vector<128xf32> to vector<1x128xf32>
    %cst_17 = arith.constant 6.400000e+01 : f32
    %27 = vector.broadcast %cst_17 : f32 to vector<1x128xf32>
    %28 = arith.divf %26, %27 : vector<1x128xf32>
    %29 = arith.mulf %20, %20 : vector<64x128xf32>
    %cst_18 = arith.constant dense<0.000000e+00> : vector<128xf32>
    %30 = vector.multi_reduction <add>, %29, %cst_18 [0] : vector<64x128xf32> to vector<128xf32>
    %31 = vector.shape_cast %30 : vector<128xf32> to vector<1x128xf32>
    %cst_19 = arith.constant 6.400000e+01 : f32
    %32 = vector.broadcast %cst_19 : f32 to vector<1x128xf32>
    %33 = arith.divf %31, %32 : vector<1x128xf32>
    %34 = arith.mulf %28, %28 : vector<1x128xf32>
    %35 = arith.subf %33, %34 : vector<1x128xf32>
    %cst_20 = arith.constant 0.000000e+00 : f32
    %36 = vector.broadcast %cst_20 : f32 to vector<1x128xf32>
    %37 = arith.maximumf %35, %36 : vector<1x128xf32>
    %38 = vector.broadcast %28 : vector<1x128xf32> to vector<64x128xf32>
    %39 = arith.subf %20, %38 : vector<64x128xf32>
    %cst_21 = arith.constant 9.99999974E-6 : f32
    %40 = vector.broadcast %cst_21 : f32 to vector<1x128xf32>
    %41 = arith.addf %37, %40 : vector<1x128xf32>
    %42 = math.rsqrt %41 : vector<1x128xf32>
    %43 = vector.broadcast %42 : vector<1x128xf32> to vector<64x128xf32>
    %44 = arith.mulf %39, %43 : vector<64x128xf32>
    %45 = vector.broadcast %22 : vector<1x128xf32> to vector<64x128xf32>
    %46 = arith.mulf %44, %45 : vector<64x128xf32>
    %47 = vector.broadcast %24 : vector<1x128xf32> to vector<64x128xf32>
    %48 = arith.addf %46, %47 : vector<64x128xf32>
    %cst_22 = arith.constant 0.000000e+00 : f32
    %49 = vector.broadcast %cst_22 : f32 to vector<64x128xf32>
    %50 = arith.maximumf %48, %49 : vector<64x128xf32>
    %c0_23 = arith.constant 0 : index
    %c3 = arith.constant 3 : index
    %c0_24 = arith.constant 0 : index
    %51 = vector.load %arg5[%c0_23, %c3, %c0_24] : memref<1x8x128xf32, #tpu.memory_space<vmem>>, vector<1x1x128xf32>
    %52 = vector.shape_cast %51 : vector<1x1x128xf32> to vector<1x128xf32>
    %c0_25 = arith.constant 0 : index
    %c4 = arith.constant 4 : index
    %c0_26 = arith.constant 0 : index
    %53 = vector.load %arg5[%c0_25, %c4, %c0_26] : memref<1x8x128xf32, #tpu.memory_space<vmem>>, vector<1x1x128xf32>
    %54 = vector.shape_cast %53 : vector<1x1x128xf32> to vector<1x128xf32>
    %cst_27 = arith.constant dense<0.000000e+00> : vector<128xf32>
    %55 = vector.multi_reduction <add>, %50, %cst_27 [0] : vector<64x128xf32> to vector<128xf32>
    %56 = vector.shape_cast %55 : vector<128xf32> to vector<1x128xf32>
    %cst_28 = arith.constant 6.400000e+01 : f32
    %57 = vector.broadcast %cst_28 : f32 to vector<1x128xf32>
    %58 = arith.divf %56, %57 : vector<1x128xf32>
    %59 = arith.mulf %50, %50 : vector<64x128xf32>
    %cst_29 = arith.constant dense<0.000000e+00> : vector<128xf32>
    %60 = vector.multi_reduction <add>, %59, %cst_29 [0] : vector<64x128xf32> to vector<128xf32>
    %61 = vector.shape_cast %60 : vector<128xf32> to vector<1x128xf32>
    %cst_30 = arith.constant 6.400000e+01 : f32
    %62 = vector.broadcast %cst_30 : f32 to vector<1x128xf32>
    %63 = arith.divf %61, %62 : vector<1x128xf32>
    %64 = arith.mulf %58, %58 : vector<1x128xf32>
    %65 = arith.subf %63, %64 : vector<1x128xf32>
    %cst_31 = arith.constant 0.000000e+00 : f32
    %66 = vector.broadcast %cst_31 : f32 to vector<1x128xf32>
    %67 = arith.maximumf %65, %66 : vector<1x128xf32>
    %68 = vector.broadcast %58 : vector<1x128xf32> to vector<64x128xf32>
    %69 = arith.subf %50, %68 : vector<64x128xf32>
    %cst_32 = arith.constant 9.99999974E-6 : f32
    %70 = vector.broadcast %cst_32 : f32 to vector<1x128xf32>
    %71 = arith.addf %67, %70 : vector<1x128xf32>
    %72 = math.rsqrt %71 : vector<1x128xf32>
    %73 = vector.broadcast %72 : vector<1x128xf32> to vector<64x128xf32>
    %74 = arith.mulf %69, %73 : vector<64x128xf32>
    %75 = vector.broadcast %52 : vector<1x128xf32> to vector<64x128xf32>
    %76 = arith.mulf %74, %75 : vector<64x128xf32>
    %77 = vector.broadcast %54 : vector<1x128xf32> to vector<64x128xf32>
    %78 = arith.addf %76, %77 : vector<64x128xf32>
    %cst_33 = arith.constant 0.000000e+00 : f32
    %79 = vector.broadcast %cst_33 : f32 to vector<64x128xf32>
    %80 = arith.maximumf %78, %79 : vector<64x128xf32>
    %c0_34 = arith.constant 0 : index
    %c0_35 = arith.constant 0 : index
    %81 = vector.load %arg6[%c0_34, %c0_35] : memref<64x128xf32, #tpu.memory_space<vmem>>, vector<64x128xf32>
    tpu.vector_store %arg6[%c0_34, %c0_35], %80 {strides = array<i32>} : memref<64x128xf32, #tpu.memory_space<vmem>>, vector<64x128xf32>,
    return
  }
  func.func @transform_0(%arg0: i32) -> i32 {
    %c0_i32 = arith.constant 0 : i32
    %c0_i32_0 = arith.constant 0 : i32
    return %c0_i32 : i32
  }
  func.func @transform_1(%arg0: i32) -> (i32, i32) {
    %c0_i32 = arith.constant 0 : i32
    %c0_i32_0 = arith.constant 0 : i32
    %c0_i32_1 = arith.constant 0 : i32
    return %c0_i32, %c0_i32_0 : i32, i32
  }
  func.func @transform_3(%arg0: i32) -> (i32, i32, i32) {
    %c0_i32 = arith.constant 0 : i32
    %c0_i32_0 = arith.constant 0 : i32
    %c0_i32_1 = arith.constant 0 : i32
    return %arg0, %c0_i32, %c0_i32_0 : i32, i32, i32
  }
  func.func @transform_4(%arg0: i32) -> (i32, i32, i32) {
    %c0_i32 = arith.constant 0 : i32
    %c0_i32_0 = arith.constant 0 : i32
    %c0_i32_1 = arith.constant 0 : i32
    return %arg0, %c0_i32, %c0_i32_0 : i32, i32, i32
  }
  func.func @transform_5(%arg0: i32) -> (i32, i32) {
    %c0_i32 = arith.constant 0 : i32
    %c0_i32_0 = arith.constant 0 : i32
    %c0_i32_1 = arith.constant 0 : i32
    return %c0_i32, %c0_i32_0 : i32, i32
  }
}

</mosaic_0001>

<llo_original>
// kernel: _encoder_pallas.1
$region0: #{_encoder_pallas.1}
  #allocation0 [shape = 'u32[]', space=smem, size = 0x4, offset = 0x4, fixed_abs, tag = 'smem constant byte address 0x4 - core index']
  #allocation1 [shape = 'u32[144,128]{1,0:T(1,128)}', space=vmem, size = 0x12000, scoped, tag = 'internal scratch']
  #allocation2 [shape = 's32[1]{0}', space=sflag, size = 0x4, scoped, tag = 'scratch operand']
  #allocation5 [shape = 's32[]', space=sflag, size = 0x4, offset = 0, fixed_abs, tag = 'sflag constant byte address 0x0 - dummy sync flag']
  %s0 = inlined_call_operand.vmem [shape: f32[3], index: 0, kind: input, shape index: {}]
  %s1 = inlined_call_operand.vmem [shape: bf16[64,64], index: 1, kind: input, shape index: {}]
  %s2 = inlined_call_operand.vmem [shape: f32[64,128], index: 2, kind: input, shape index: {}, may-alias: {2,5}]
  %s3 = inlined_call_operand.vmem [shape: bf16[3,128,128], index: 3, kind: input, shape index: {}]
  %s4 = inlined_call_operand.vmem [shape: f32[3,8,128], index: 4, kind: input, shape index: {}]
  %s5 = inlined_call_operand.vmem [shape: f32[64,128], index: 5, kind: output, shape index: {}, may-alias: {2,5}]
  %s6 = sld [smem:[#allocation0]]
  $region91: #{_encoder_pallas.1} parent=0
    _
  %s8 = ssub.s32 1, %s6
  %s9 = scalar_select 0, %s8, %s6
  $region1: #{_encoder_pallas.1} parent=0
    #allocation3 [shape = 'u8[512]{0}', space=smem, size = 0x200, scoped, tag = 'input window, operand 0, single buffered']
    #allocation4 [shape = 's32[2]{0}', space=sflag, size = 0x8, scoped, tag = 'scoped memory for _encoder_pallas.1']
    %10 = vsyncpa [#allocation4], 0
    loop: start=0, step=1, limit=5
    $region2: #{_encoder_pallas.1} parent=1 // loop_pre_header
      _
    $region3: #{_encoder_pallas.1} parent=1 // loop_header
      %s12 = sphi 0, %s16
      %p13 = scmp.ge.s32.totalorder %s12, 5
      %s20 = sphi 0, %s20
      %s22 = sphi 0, %s20
      %s23 = sphi 0, %s22
      %s37 = sphi 0, %s23
      %s41 = sphi 0, %s41
      %s43 = sphi 0, %s41
      %s44 = sphi 0, %s43
      %s58 = sphi 0, %s44
      %s64 = sphi 0, %s66
      %s67 = sphi 0, %s64
      %s68 = sphi 0, %s67
      %s84 = sphi 0, %s68
      %s90 = sphi 0, %s92
      %s93 = sphi 0, %s90
      %s94 = sphi 0, %s93
      %s110 = sphi 0, %s94
      %s114 = sphi 0, %s114
      %s116 = sphi 0, %s114
      %s117 = sphi 0, %s116
      %s131 = sphi 0, %s117
    $region4: #{_encoder_pallas.1} parent=1 // loop_header_branch
      %15 = sbr.rel (%p13) target = $region8
    $region5: #{_encoder_pallas.1} parent=1 // loop_body
      %s17 = ssub.s32 %s12, 1
      %s18 = ssub.s32 %s12, 2
      %s19 = sadd.s32 %s12, 1
      %s21 = sadd.s32 %s20, 1
      %p24 = scmp.eq.s32.totalorder %s12, 2
      %p25 = scmp.ne.s32.totalorder %s20, %s22
      %p26 = scmp.eq.s32.totalorder %s12, 0
      %p27 = por %p25, %p26
      %p28 = scmp.ne.s32.totalorder %s20, %s22
      %p29 = scmp.eq.s32.totalorder %s17, 2
      %p30 = por %p28, %p29
      %p31 = scmp.ne.s32.totalorder %s22, %s23
      %p32 = scmp.eq.s32.totalorder %s17, 0
      %p33 = por %p31, %p32
      %p34 = scmp.ne.s32.totalorder %s22, %s23
      %p35 = scmp.eq.s32.totalorder %s18, 2
      %p36 = por %p34, %p35
      %p38 = scmp.ne.s32.totalorder %s23, %s37
      %p39 = scmp.eq.s32.totalorder %s18, 0
      %p40 = por %p38, %p39
      %s42 = sadd.s32 %s41, 1
      %p45 = scmp.eq.s32.totalorder %s12, 2
      %p46 = scmp.ne.s32.totalorder %s41, %s43
      %p47 = scmp.eq.s32.totalorder %s12, 0
      %p48 = por %p46, %p47
      %p49 = scmp.ne.s32.totalorder %s41, %s43
      %p50 = scmp.eq.s32.totalorder %s17, 2
      %p51 = por %p49, %p50
      %p52 = scmp.ne.s32.totalorder %s43, %s44
      %p53 = scmp.eq.s32.totalorder %s17, 0
      %p54 = por %p52, %p53
      %p55 = scmp.ne.s32.totalorder %s43, %s44
      %p56 = scmp.eq.s32.totalorder %s18, 2
      %p57 = por %p55, %p56
      %p59 = scmp.ne.s32.totalorder %s44, %s58
      %p60 = scmp.eq.s32.totalorder %s18, 0
      %p61 = por %p59, %p60
      %s62 = ssub.s32 %s12, %s19
      %p63 = scmp.eq.s32.totalorder %s62, 0
      %s65 = sadd.s32 %s64, 1
      %s66 = scalar_select %p63, %s64, %s65
      %p69 = pneg %p63
      %p70 = scmp.eq.s32.totalorder %s12, 2
      %p71 = por %p69, %p70
      %p72 = scmp.ne.s32.totalorder %s64, %s67
      %p73 = scmp.eq.s32.totalorder %s12, 0
      %p74 = por %p72, %p73
      %p75 = scmp.ne.s32.totalorder %s64, %s67
      %p76 = scmp.eq.s32.totalorder %s17, 2
      %p77 = por %p75, %p76
      %p78 = scmp.ne.s32.totalorder %s67, %s68
      %p79 = scmp.eq.s32.totalorder %s17, 0
      %p80 = por %p78, %p79
      %p81 = scmp.ne.s32.totalorder %s67, %s68
      %p82 = scmp.eq.s32.totalorder %s18, 2
      %p83 = por %p81, %p82
      %p85 = scmp.ne.s32.totalorder %s68, %s84
      %p86 = scmp.eq.s32.totalorder %s18, 0
      %p87 = por %p85, %p86
      %s88 = ssub.s32 %s12, %s19
      %p89 = scmp.eq.s32.totalorder %s88, 0
      %s91 = sadd.s32 %s90, 1
      %s92 = scalar_select %p89, %s90, %s91
      %p95 = pneg %p89
      %p96 = scmp.eq.s32.totalorder %s12, 2
      %p97 = por %p95, %p96
      %p98 = scmp.ne.s32.totalorder %s90, %s93
      %p99 = scmp.eq.s32.totalorder %s12, 0
      %p100 = por %p98, %p99
      %p101 = scmp.ne.s32.totalorder %s90, %s93
      %p102 = scmp.eq.s32.totalorder %s17, 2
      %p103 = por %p101, %p102
      %p104 = scmp.ne.s32.totalorder %s93, %s94
      %p105 = scmp.eq.s32.totalorder %s17, 0
      %p106 = por %p104, %p105
      %p107 = scmp.ne.s32.totalorder %s93, %s94
      %p108 = scmp.eq.s32.totalorder %s18, 2
      %p109 = por %p107, %p108
      %p111 = scmp.ne.s32.totalorder %s94, %s110
      %p112 = scmp.eq.s32.totalorder %s18, 0
      %p113 = por %p111, %p112
      %s115 = sadd.s32 %s114, 1
      %p118 = scmp.eq.s32.totalorder %s12, 2
      %p119 = scmp.ne.s32.totalorder %s114, %s116
      %p120 = scmp.eq.s32.totalorder %s12, 0
      %p121 = por %p119, %p120
      %p122 = scmp.ne.s32.totalorder %s114, %s116
      %p123 = scmp.eq.s32.totalorder %s17, 2
      %p124 = por %p122, %p123
      %p125 = scmp.ne.s32.totalorder %s116, %s117
      %p126 = scmp.eq.s32.totalorder %s17, 0
      %p127 = por %p125, %p126
      %p128 = scmp.ne.s32.totalorder %s116, %s117
      %p129 = scmp.eq.s32.totalorder %s18, 2
      %p130 = por %p128, %p129
      %p132 = scmp.ne.s32.totalorder %s117, %s131
      %p133 = scmp.eq.s32.totalorder %s18, 0
      %p134 = por %p132, %p133
      %p135 = scmp.le.s32.totalorder 1, %s12
      %p136 = scmp.lt.s32.totalorder %s12, 4
      %p137 = pnand %p135, %p136
      %p138 = pneg %p137
      // Predicated region
      $region9: #{_encoder_pallas.1} parent=5 // pred_check
        _
      $region10: #{_encoder_pallas.1} parent=5 // pred_check_branch
        %140 = sbr.rel (%p137) target = $region12
      $region11: #{_encoder_pallas.1} parent=5 // pred_region
        %s141 = ssub.s32 %s12, 1
        // Predicated region
        $region13: #{_encoder_pallas.1} parent=11 // pred_check
          %p142 = pneg %p33
        $region14: #{_encoder_pallas.1} parent=11 // pred_check_branch
          %144 = sbr.rel (%p142) target = $region16
        $region15: #{_encoder_pallas.1} parent=11 // pred_region
          %s146 = ssub.s32 16, 16
          %147 = vsyncadd [#allocation4], %s146
          %s149 = sshll.u32 %s0, 4
          %s150 = int_to_ptr.vmem [resolvable:$true] %s149
          %152 = dma.vmem_to_smem %s150, 16, [#allocation3], [#allocation4]
        $region16: #{_encoder_pallas.1} parent=11 // pred_fallthru
          _
        // Predicated region
        $region17: #{_encoder_pallas.1} parent=11 // pred_check
          %p153 = pneg %p54
        $region18: #{_encoder_pallas.1} parent=11 // pred_check_branch
          %155 = sbr.rel (%p153) target = $region20
        $region19: #{_encoder_pallas.1} parent=11 // pred_region
          _
        $region20: #{_encoder_pallas.1} parent=11 // pred_fallthru
          _
      $region12: #{_encoder_pallas.1} parent=5 // pred_fallthru
        _
      %p156 = scmp.lt.s32.totalorder %s12, 3
      // Predicated region
      $region21: #{_encoder_pallas.1} parent=5 // pred_check
        %p157 = pneg %p156
      $region22: #{_encoder_pallas.1} parent=5 // pred_check_branch
        %159 = sbr.rel (%p157) target = $region24
      $region23: #{_encoder_pallas.1} parent=5 // pred_region
        // Predicated region
        $region25: #{_encoder_pallas.1} parent=23 // pred_check
          %p160 = pneg %p74
        $region26: #{_encoder_pallas.1} parent=23 // pred_check_branch
          %162 = sbr.rel (%p160) target = $region28
        $region27: #{_encoder_pallas.1} parent=23 // pred_region
          %p163 = scmp.lt.s32.totalorder %s12, 2
          %s164 = scalar_select %p163, %s12, 2
          %s165 = smul.addr %s164, 16
          %s166 = smul.addr %s165, 4
          %s167 = scalar_lea.vmem %s3, %s166
        $region28: #{_encoder_pallas.1} parent=23 // pred_fallthru
          _
        // Predicated region
        $region29: #{_encoder_pallas.1} parent=23 // pred_check
          %p168 = pneg %p100
        $region30: #{_encoder_pallas.1} parent=23 // pred_check_branch
          %170 = sbr.rel (%p168) target = $region32
        $region31: #{_encoder_pallas.1} parent=23 // pred_region
          %p171 = scmp.lt.s32.totalorder %s12, 2
          %s172 = scalar_select %p171, %s12, 2
          %s173 = smul.addr %s172, 8
          %s174 = scalar_lea.vmem %s4, %s173
        $region32: #{_encoder_pallas.1} parent=23 // pred_fallthru
          _
      $region24: #{_encoder_pallas.1} parent=5 // pred_fallthru
        _
      %p175 = scmp.le.s32.totalorder 1, %s12
      %p176 = scmp.lt.s32.totalorder %s12, 4
      %p177 = pnand %p175, %p176
      %p178 = pneg %p177
      // Predicated region
      $region33: #{_encoder_pallas.1} parent=5 // pred_check
        _
      $region34: #{_encoder_pallas.1} parent=5 // pred_check_branch
        %180 = sbr.rel (%p177) target = $region36
      $region35: #{_encoder_pallas.1} parent=5 // pred_region
        %s181 = ssub.s32 %s12, 1
        // Predicated region
        $region37: #{_encoder_pallas.1} parent=35 // pred_check
          %p182 = pneg %p33
        $region38: #{_encoder_pallas.1} parent=35 // pred_check_branch
          %184 = sbr.rel (%p182) target = $region40
        $region39: #{_encoder_pallas.1} parent=35 // pred_region
          %185 = dma.done [#allocation4], 16
        $region40: #{_encoder_pallas.1} parent=35 // pred_fallthru
          _
        %186 = sfence
        %p187 = pneg %p33
        %p188 = pneg %p30
        %p189 = pneg %p54
        %p190 = pneg %p51
        %p191 = scmp.lt.s32.totalorder %s17, 2
        %s192 = scalar_select %p191, %s17, 2
        %s193 = smul.addr %s192, 16
        %s194 = smul.addr %s193, 4
        %s195 = scalar_lea.vmem %s3, %s194
        %p196 = pneg %p80
        %p197 = pneg %p77
        %p198 = scmp.lt.s32.totalorder %s17, 2
        %s199 = scalar_select %p198, %s17, 2
        %s200 = smul.addr %s199, 8
        %s201 = scalar_lea.vmem %s4, %s200
        %p202 = pneg %p106
        %p203 = pneg %p103
        %p204 = pneg %p127
        %p205 = pneg %p124
        %p206 = scmp.lt.s32.totalorder %s17, 2
        %s207 = scalar_select %p206, %s17, 2
        %s208 = smul.addr %s207, 16
        %s209 = smul.addr %s208, 4
        %s210 = scalar_lea.vmem %s3, %s209
        %p211 = scmp.lt.s32.totalorder %s17, 2
        %s212 = scalar_select %p211, %s17, 2
        %s213 = smul.addr %s212, 8
        %s214 = scalar_lea.vmem %s4, %s213
        %p216 = scmp.eq.s32.totalorder %s17, 0
        // Predicated region
        $region41: #{_encoder_pallas.1} parent=35 // pred_check
          %p217 = pneg %p216
        $region42: #{_encoder_pallas.1} parent=35 // pred_check_branch
          %219 = sbr.rel (%p217) target = $region44
        $region43: #{_encoder_pallas.1} parent=35 // pred_region
          %p221 = scmp.lt.u32.totalorder 64, 8
          %p222 = pneg %p221
          // Predicated region
          $region45: #{_encoder_pallas.1} parent=43 // pred_check
            _
          $region46: #{_encoder_pallas.1} parent=43 // pred_check_branch
            %224 = sbr.rel (%p221) target = $region48
          $region47: #{_encoder_pallas.1} parent=43 // pred_region
            %s239 = sand.u32 64, 7
            %p240 = scmp.eq.s32.totalorder %s239, 0
            // Predicated region
            $region60: #{_encoder_pallas.1} parent=47 // pred_check
              %p241 = pneg %p240
            $region61: #{_encoder_pallas.1} parent=47 // pred_check_branch
              %243 = sbr.rel (%p241) target = $region63
            $region62: #{_encoder_pallas.1} parent=47 // pred_region
              loop: start=0, step=1, limit=1
              $region64: #{_encoder_pallas.1} parent=62 // loop_pre_header
                _
              $region65: #{_encoder_pallas.1} parent=62 // loop_header
                %s245 = sphi 0, %s249
                %p246 = scmp.ge.s32.totalorder %s245, 1
                %s250 = sphi %s2, %s2
                %s251 = sphi %s5, %s5
              $region66: #{_encoder_pallas.1} parent=62 // loop_header_branch
                %248 = sbr.rel (%p246) target = $region70
              $region67: #{_encoder_pallas.1} parent=62 // loop_body
                %v252 = vld [vmem:[%s250] sm:$0xff]
                %253 = vst [vmem:[%s251] sm:$0xff] %v252
                %v254 = vld [vmem:[%s250 + $0x8] sm:$0xff]
                %255 = vst [vmem:[%s251 + $0x8] sm:$0xff] %v254
                %v256 = vld [vmem:[%s250 + $0x10] sm:$0xff]
                %257 = vst [vmem:[%s251 + $0x10] sm:$0xff] %v256
                %v258 = vld [vmem:[%s250 + $0x18] sm:$0xff]
                %259 = vst [vmem:[%s251 + $0x18] sm:$0xff] %v258
                %v260 = vld [vmem:[%s250 + $0x20] sm:$0xff]
                %261 = vst [vmem:[%s251 + $0x20] sm:$0xff] %v260
                %v262 = vld [vmem:[%s250 + $0x28] sm:$0xff]
                %263 = vst [vmem:[%s251 + $0x28] sm:$0xff] %v262
                %v264 = vld [vmem:[%s250 + $0x30] sm:$0xff]
                %265 = vst [vmem:[%s251 + $0x30] sm:$0xff] %v264
                %v266 = vld [vmem:[%s250 + $0x38] sm:$0xff]
                %267 = vst [vmem:[%s251 + $0x38] sm:$0xff] %v266
              $region68: #{_encoder_pallas.1} parent=62 // loop_footer
                %s249 = sadd.s32 1, %s245
              $region69: #{_encoder_pallas.1} parent=62 // loop_footer_branch
                %244 = sbr.rel target = $region65
              $region70: #{_encoder_pallas.1} parent=62 // loop_exit
                _
            $region63: #{_encoder_pallas.1} parent=47 // pred_fallthru
              _
            %p268 = pneg %p240
            // Predicated region
            $region71: #{_encoder_pallas.1} parent=47 // pred_check
              _
            $region72: #{_encoder_pallas.1} parent=47 // pred_check_branch
              %270 = sbr.rel (%p240) target = $region74
            $region73: #{_encoder_pallas.1} parent=47 // pred_region
              %s271 = sand.u32 64, 7
            $region74: #{_encoder_pallas.1} parent=47 // pred_fallthru
              _
          $region48: #{_encoder_pallas.1} parent=43 // pred_fallthru
            _
          // Predicated region
          $region49: #{_encoder_pallas.1} parent=43 // pred_check
            %p225 = pneg %p221
          $region50: #{_encoder_pallas.1} parent=43 // pred_check_branch
            %227 = sbr.rel (%p225) target = $region52
          $region51: #{_encoder_pallas.1} parent=43 // pred_region
            %s228 = sshllo.u32 0, 64
            loop: start=0, step=1, limit=1
            $region53: #{_encoder_pallas.1} parent=51 // loop_pre_header
              _
            $region54: #{_encoder_pallas.1} parent=51 // loop_header
              %s230 = sphi 0, %s234
              %p231 = scmp.ge.s32.totalorder %s230, 1
              %s235 = sphi %s2, %s2
              %s236 = sphi %s5, %s5
            $region55: #{_encoder_pallas.1} parent=51 // loop_header_branch
              %233 = sbr.rel (%p231) target = $region59
            $region56: #{_encoder_pallas.1} parent=51 // loop_body
              %v237 = vld [vmem:[%s235] sm:%s228]
              %238 = vst [vmem:[%s236] sm:%s228] %v237
            $region57: #{_encoder_pallas.1} parent=51 // loop_footer
              %s234 = sadd.s32 1, %s230
            $region58: #{_encoder_pallas.1} parent=51 // loop_footer_branch
              %229 = sbr.rel target = $region54
            $region59: #{_encoder_pallas.1} parent=51 // loop_exit
              _
          $region52: #{_encoder_pallas.1} parent=43 // pred_fallthru
            _
          // Predicated region
          $region75: #{_encoder_pallas.1} parent=43 // pred_check
            _
          $region76: #{_encoder_pallas.1} parent=43 // pred_check_branch
            %274 = sbr.rel (0) target = $region78
          $region77: #{_encoder_pallas.1} parent=43 // pred_region
            %275 = vsyncadd [#allocation2], 1024
          $region78: #{_encoder_pallas.1} parent=43 // pred_fallthru
            _
          %s276 = smul.u32 64, 1
          %s277 = sshll.u32 %s276, 4
          %278 = dma.done [#allocation2], %s277
        $region44: #{_encoder_pallas.1} parent=35 // pred_fallthru
          _
        %v279 = vld [vmem:[%s5] sm:$0xff]
        %v280 = vld [vmem:[%s5 + $0x8] sm:$0xff]
        %v281 = vld [vmem:[%s5 + $0x10] sm:$0xff]
        %v282 = vld [vmem:[%s5 + $0x18] sm:$0xff]
        %v283 = vld [vmem:[%s5 + $0x20] sm:$0xff]
        %v284 = vld [vmem:[%s5 + $0x28] sm:$0xff]
        %v285 = vld [vmem:[%s5 + $0x30] sm:$0xff]
        %v286 = vld [vmem:[%s5 + $0x38] sm:$0xff]
        %v287 = vld [vmem:[%s1] sm:$0xf]
        %v288 = vld [vmem:[%s1 + $0x4] sm:$0xf]
        %v289 = vld [vmem:[%s1 + $0x8] sm:$0xf]
        %v290 = vld [vmem:[%s1 + $0xc] sm:$0xf]
        %v291 = vld [vmem:[%s1 + $0x10] sm:$0xf]
        %v292 = vld [vmem:[%s1 + $0x14] sm:$0xf]
        %v293 = vld [vmem:[%s1 + $0x18] sm:$0xf]
        %v294 = vld [vmem:[%s1 + $0x1c] sm:$0xf]
        %v295 = vpack.c.bf16 %v280, %v279
        %v296 = vpack.c.bf16 %v282, %v281
        %v297 = vpack.c.bf16 %v284, %v283
        %v298 = vpack.c.bf16 %v286, %v285
        %v307 = vunpack.c.l.b16 %v287
        %v308 = vunpack.c.l.b16 %v288
        %v309 = vunpack.c.l.b16 %v289
        %v310 = vunpack.c.l.b16 %v290
        %v311 = vunpack.c.l.b16 %v291
        %v312 = vunpack.c.l.b16 %v292
        %v313 = vunpack.c.l.b16 %v293
        %v314 = vunpack.c.l.b16 %v294
        %v315 = vpack.c.b16 %v308, %v307
        %v316 = vpack.c.b16 %v310, %v309
        %v317 = vpack.c.b16 %v312, %v311
        %v318 = vpack.c.b16 %v314, %v313
        %vm319 = vcmask 523264
        %v321 = vsel %vm319, %v315, 0
        %v324 = vsel %vm319, %v316, 0
        %v327 = vsel %vm319, %v317, 0
        %v330 = vsel %vm319, %v318, 0
        %332 = vmatprep.subr.bf16.mxu0 0
        %333 = vmatpush1.bf16.msra.mxu0 %v295
        %334 = vmatprep.subr.bf16.mxu0 0
        %335 = vmatpush1.bf16.msra.mxu0 %v296
        %336 = vmatprep.subr.bf16.mxu0 0
        %337 = vmatpush1.bf16.msra.mxu0 %v297
        %338 = vmatprep.subr.bf16.mxu0 0
        %339 = vmatpush1.bf16.msra.mxu0 %v298
        %340 = vmatprep.subr.bf16.mxu0 0
        %341 = vmatpush1.bf16.msra.mxu0 0
        %342 = vmatprep.subr.bf16.mxu0 0
        %343 = vmatpush1.bf16.msra.mxu0 0
        %344 = vmatprep.subr.bf16.mxu0 0
        %345 = vmatpush1.bf16.msra.mxu0 0
        %346 = vmatprep.subr.bf16.mxu0 0
        %347 = vmatpush1.bf16.msra.mxu0 0
        %348 = vmatprep.subr.bf16.mxu0 0
        %349 = vmatpush1.bf16.msra.mxu0 0
        %350 = vmatprep.subr.bf16.mxu0 0
        %351 = vmatpush1.bf16.msra.mxu0 0
        %352 = vmatprep.subr.bf16.mxu0 0
        %353 = vmatpush1.bf16.msra.mxu0 0
        %354 = vmatprep.subr.bf16.mxu0 0
        %355 = vmatpush1.bf16.msra.mxu0 0
        %356 = vmatprep.subr.bf16.mxu0 0
        %357 = vmatpush1.bf16.msra.mxu0 0
        %358 = vmatprep.subr.bf16.mxu0 0
        %359 = vmatpush1.bf16.msra.mxu0 0
        %360 = vmatprep.subr.bf16.mxu0 0
        %361 = vmatpush1.bf16.msra.mxu0 0
        %362 = vmatprep.subr.bf16.mxu0 0
        %363 = vmatpush1.bf16.msra.mxu0 0
        %364 = vmatprep.mubr.bf16.mxu0 0
        %365 = vmatmul.mubr.bf16.gmra.mrb[0].mxu0 %v321
        %v366 = vpop.f32.mrb[0].mxu0
        %v367 = vadd.f32 0.0, %v366
        %v368 = vpop.f32.mrb[0].mxu0
        %v369 = vpop.f32.mrb[0].mxu0
        %v370 = vadd.f32 0.0, %v369
        %v371 = vpop.f32.mrb[0].mxu0
        %372 = vmatprep.mubr.bf16.mxu0 0
        %373 = vmatmul.mubr.bf16.gmra.mrb[0].mxu0 %v324
        %v374 = vpop.f32.mrb[0].mxu0
        %v375 = vadd.f32 0.0, %v374
        %v376 = vpop.f32.mrb[0].mxu0
        %v377 = vpop.f32.mrb[0].mxu0
        %v378 = vadd.f32 0.0, %v377
        %v379 = vpop.f32.mrb[0].mxu0
        %380 = vmatprep.mubr.bf16.mxu0 0
        %381 = vmatmul.mubr.bf16.gmra.mrb[0].mxu0 %v327
        %v382 = vpop.f32.mrb[0].mxu0
        %v383 = vadd.f32 0.0, %v382
        %v384 = vpop.f32.mrb[0].mxu0
        %v385 = vpop.f32.mrb[0].mxu0
        %v386 = vadd.f32 0.0, %v385
        %v387 = vpop.f32.mrb[0].mxu0
        %388 = vmatprep.mubr.bf16.mxu0 0
        %389 = vmatmul.mubr.bf16.gmra.mrb[0].mxu0 %v330
        %v390 = vpop.f32.mrb[0].mxu0
        %v391 = vadd.f32 0.0, %v390
        %v392 = vpop.f32.mrb[0].mxu0
        %v393 = vpop.f32.mrb[0].mxu0
        %v394 = vadd.f32 0.0, %v393
        %v395 = vpop.f32.mrb[0].mxu0
        %396 = vdwg.mxu0
        %s397 = sld [smem:[#allocation3 + %s17]]
        %s398 = sadd.f32 %s397, 1.0
        %v399 = vstv %s398
        %v400 = vmul.f32 %v399, %v279
        %v401 = vmul.f32 %v399, %v280
        %v402 = vmul.f32 %v399, %v281
        %v403 = vmul.f32 %v399, %v282
        %v404 = vmul.f32 %v399, %v283
        %v405 = vmul.f32 %v399, %v284
        %v406 = vmul.f32 %v399, %v285
        %v407 = vmul.f32 %v399, %v286
        %v408 = vadd.f32 %v400, %v367
        %v409 = vadd.f32 %v401, %v370
        %v410 = vadd.f32 %v402, %v375
        %v411 = vadd.f32 %v403, %v378
        %v412 = vadd.f32 %v404, %v383
        %v413 = vadd.f32 %v405, %v386
        %v414 = vadd.f32 %v406, %v391
        %v415 = vadd.f32 %v407, %v394
        %v416 = vpack.c.bf16 %v409, %v408
        %v417 = vpack.c.bf16 %v411, %v410
        %v418 = vpack.c.bf16 %v413, %v412
        %v419 = vpack.c.bf16 %v415, %v414
        %v420 = vld [vmem:[%s210] sm:$0xf]
        %v421 = vld [vmem:[%s210 + $0x4] sm:$0xf]
        %v422 = vld [vmem:[%s210 + $0x8] sm:$0xf]
        %v423 = vld [vmem:[%s210 + $0xc] sm:$0xf]
        %v424 = vld [vmem:[%s210 + $0x10] sm:$0xf]
        %v425 = vld [vmem:[%s210 + $0x14] sm:$0xf]
        %v426 = vld [vmem:[%s210 + $0x18] sm:$0xf]
        %v427 = vld [vmem:[%s210 + $0x1c] sm:$0xf]
        %v428 = vld [vmem:[%s210 + $0x20] sm:$0xf]
        %v429 = vld [vmem:[%s210 + $0x24] sm:$0xf]
        %v430 = vld [vmem:[%s210 + $0x28] sm:$0xf]
        %v431 = vld [vmem:[%s210 + $0x2c] sm:$0xf]
        %v432 = vld [vmem:[%s210 + $0x30] sm:$0xf]
        %v433 = vld [vmem:[%s210 + $0x34] sm:$0xf]
        %v434 = vld [vmem:[%s210 + $0x38] sm:$0xf]
        %v435 = vld [vmem:[%s210 + $0x3c] sm:$0xf]
        %v436 = vld [vmem:[%s214] sm:$0x1]
        %v437 = vlaneseq
        %v438 = vshrl.u32 %v437, 7
        %v439 = vsub.s32 0, %v438
        %v440 = vrot.slane %v436, %v439
        %v457 = vunpack.c.l.b16 %v420
        %v458 = vunpack.c.l.b16 %v421
        %v459 = vunpack.c.l.b16 %v422
        %v460 = vunpack.c.l.b16 %v423
        %v461 = vunpack.c.l.b16 %v424
        %v462 = vunpack.c.l.b16 %v425
        %v463 = vunpack.c.l.b16 %v426
        %v464 = vunpack.c.l.b16 %v427
        %v465 = vunpack.c.l.b16 %v428
        %v466 = vunpack.c.l.b16 %v429
        %v467 = vunpack.c.l.b16 %v430
        %v468 = vunpack.c.l.b16 %v431
        %v469 = vunpack.c.l.b16 %v432
        %v470 = vunpack.c.l.b16 %v433
        %v471 = vunpack.c.l.b16 %v434
        %v472 = vunpack.c.l.b16 %v435
        %v473 = vpack.c.b16 %v458, %v457
        %v474 = vpack.c.b16 %v460, %v459
        %v475 = vpack.c.b16 %v462, %v461
        %v476 = vpack.c.b16 %v464, %v463
        %v477 = vpack.c.b16 %v466, %v465
        %v478 = vpack.c.b16 %v468, %v467
        %v479 = vpack.c.b16 %v470, %v469
        %v480 = vpack.c.b16 %v472, %v471
        %489 = vmatprep.subr.bf16.mxu0 0
        %490 = vmatpush1.bf16.msra.mxu0 %v473
        %491 = vmatprep.subr.bf16.mxu0 0
        %492 = vmatpush1.bf16.msra.mxu0 %v474
        %493 = vmatprep.subr.bf16.mxu0 0
        %494 = vmatpush1.bf16.msra.mxu0 %v475
        %495 = vmatprep.subr.bf16.mxu0 0
        %496 = vmatpush1.bf16.msra.mxu0 %v476
        %497 = vmatprep.subr.bf16.mxu0 0
        %498 = vmatpush1.bf16.msra.mxu0 %v477
        %499 = vmatprep.subr.bf16.mxu0 0
        %500 = vmatpush1.bf16.msra.mxu0 %v478
        %501 = vmatprep.subr.bf16.mxu0 0
        %502 = vmatpush1.bf16.msra.mxu0 %v479
        %503 = vmatprep.subr.bf16.mxu0 0
        %504 = vmatpush1.bf16.msra.mxu0 %v480
        %505 = vmatprep.subr.bf16.mxu0 0
        %506 = vmatpush1.bf16.msra.mxu0 0
        %507 = vmatprep.subr.bf16.mxu0 0
        %508 = vmatpush1.bf16.msra.mxu0 0
        %509 = vmatprep.subr.bf16.mxu0 0
        %510 = vmatpush1.bf16.msra.mxu0 0
        %511 = vmatprep.subr.bf16.mxu0 0
        %512 = vmatpush1.bf16.msra.mxu0 0
        %513 = vmatprep.subr.bf16.mxu0 0
        %514 = vmatpush1.bf16.msra.mxu0 0
        %515 = vmatprep.subr.bf16.mxu0 0
        %516 = vmatpush1.bf16.msra.mxu0 0
        %517 = vmatprep.subr.bf16.mxu0 0
        %518 = vmatpush1.bf16.msra.mxu0 0
        %519 = vmatprep.subr.bf16.mxu0 0
        %520 = vmatpush1.bf16.msra.mxu0 0
        %521 = vmatprep.mubr.bf16.mxu0 0
        %522 = vmatmul.mubr.bf16.gmra.mrb[0].mxu0 %v416
        %v523 = vpop.f32.mrb[0].mxu0
        %v524 = vadd.f32 %v440, %v523
        %v525 = vpop.f32.mrb[0].mxu0
        %v526 = vpop.f32.mrb[0].mxu0
        %v527 = vadd.f32 %v440, %v526
        %v528 = vpop.f32.mrb[0].mxu0
        %529 = vmatprep.mubr.bf16.mxu0 0
        %530 = vmatmul.mubr.bf16.gmra.mrb[0].mxu0 %v417
        %v531 = vpop.f32.mrb[0].mxu0
        %v532 = vadd.f32 %v440, %v531
        %v533 = vpop.f32.mrb[0].mxu0
        %v534 = vpop.f32.mrb[0].mxu0
        %v535 = vadd.f32 %v440, %v534
        %v536 = vpop.f32.mrb[0].mxu0
        %537 = vmatprep.mubr.bf16.mxu0 0
        %538 = vmatmul.mubr.bf16.gmra.mrb[0].mxu0 %v418
        %v539 = vpop.f32.mrb[0].mxu0
        %v540 = vadd.f32 %v440, %v539
        %v541 = vpop.f32.mrb[0].mxu0
        %v542 = vpop.f32.mrb[0].mxu0
        %v543 = vadd.f32 %v440, %v542
        %v544 = vpop.f32.mrb[0].mxu0
        %545 = vmatprep.mubr.bf16.mxu0 0
        %546 = vmatmul.mubr.bf16.gmra.mrb[0].mxu0 %v419
        %v547 = vpop.f32.mrb[0].mxu0
        %v548 = vadd.f32 %v440, %v547
        %v549 = vpop.f32.mrb[0].mxu0
        %v550 = vpop.f32.mrb[0].mxu0
        %v551 = vadd.f32 %v440, %v550
        %v552 = vpop.f32.mrb[0].mxu0
        %553 = vdwg.mxu0
        %v554 = vld [vmem:[%s214 + $0x1] sm:$0x1]
        %v555 = vld [vmem:[%s214 + $0x2] sm:$0x1]
        %v556 = vadd.f32 %v524, %v527
        %v557 = vadd.f32 %v556, %v532
        %v558 = vadd.f32 %v557, %v535
        %v559 = vadd.f32 %v558, %v540
        %v560 = vadd.f32 %v559, %v543
        %v561 = vadd.f32 %v560, %v548
        %v562 = vadd.f32 %v561, %v551
        %v563 = vrot.slane %v562, 4
        %v564 = vadd.f32 %v562, %v563
        %v565 = vrot.slane %v564, 2
        %v566 = vadd.f32 %v564, %v565
        %v567 = vrot.slane %v566, 1
        %v568 = vadd.f32 %v566, %v567
        %v569 = vrcp.pop 64.0
        %v570 = vmul.f32 %v568, %v569
        %v571 = vmul.f32 %v524, %v524
        %v572 = vmul.f32 %v527, %v527
        %v573 = vmul.f32 %v532, %v532
        %v574 = vmul.f32 %v535, %v535
        %v575 = vmul.f32 %v540, %v540
        %v576 = vmul.f32 %v543, %v543
        %v577 = vmul.f32 %v548, %v548
        %v578 = vmul.f32 %v551, %v551
        %v579 = vadd.f32 %v571, %v572
        %v580 = vadd.f32 %v579, %v573
        %v581 = vadd.f32 %v580, %v574
        %v582 = vadd.f32 %v581, %v575
        %v583 = vadd.f32 %v582, %v576
        %v584 = vadd.f32 %v583, %v577
        %v585 = vadd.f32 %v584, %v578
        %v586 = vrot.slane %v585, 4
        %v587 = vadd.f32 %v585, %v586
        %v588 = vrot.slane %v587, 2
        %v589 = vadd.f32 %v587, %v588
        %v590 = vrot.slane %v589, 1
        %v591 = vadd.f32 %v589, %v590
        %v592 = vmul.f32 %v591, %v569
        %v593 = vmul.f32 %v570, %v570
        %v594 = vsub.f32 %v592, %v593
        %v595 = vmax.f32 %v594, 0.0
        %v596 = vsub.f32 %v524, %v570
        %v597 = vsub.f32 %v527, %v570
        %v598 = vsub.f32 %v532, %v570
        %v599 = vsub.f32 %v535, %v570
        %v600 = vsub.f32 %v540, %v570
        %v601 = vsub.f32 %v543, %v570
        %v602 = vsub.f32 %v548, %v570
        %v603 = vsub.f32 %v551, %v570
        %v604 = vadd.f32 %v595, 1e-05
        %v605 = vrsqrt.pop %v604
        %v606 = vmul.f32 %v596, %v605
        %v607 = vmul.f32 %v597, %v605
        %v608 = vmul.f32 %v598, %v605
        %v609 = vmul.f32 %v599, %v605
        %v610 = vmul.f32 %v600, %v605
        %v611 = vmul.f32 %v601, %v605
        %v612 = vmul.f32 %v602, %v605
        %v613 = vmul.f32 %v603, %v605
        %v614 = vlaneseq
        %v615 = vshrl.u32 %v614, 7
        %v616 = vsub.s32 0, %v615
        %v617 = vrot.slane %v554, %v616
        %v618 = vmul.f32 %v606, %v617
        %v619 = vmul.f32 %v607, %v617
        %v620 = vmul.f32 %v608, %v617
        %v621 = vmul.f32 %v609, %v617
        %v622 = vmul.f32 %v610, %v617
        %v623 = vmul.f32 %v611, %v617
        %v624 = vmul.f32 %v612, %v617
        %v625 = vmul.f32 %v613, %v617
        %v626 = vlaneseq
        %v627 = vshrl.u32 %v626, 7
        %v628 = vsub.s32 0, %v627
        %v629 = vrot.slane %v555, %v628
        %v630 = vadd.f32 %v618, %v629
        %v631 = vadd.f32 %v619, %v629
        %v632 = vadd.f32 %v620, %v629
        %v633 = vadd.f32 %v621, %v629
        %v634 = vadd.f32 %v622, %v629
        %v635 = vadd.f32 %v623, %v629
        %v636 = vadd.f32 %v624, %v629
        %v637 = vadd.f32 %v625, %v629
        %v638 = vmax.f32 %v630, 0.0
        %v639 = vmax.f32 %v631, 0.0
        %v640 = vmax.f32 %v632, 0.0
        %v641 = vmax.f32 %v633, 0.0
        %v642 = vmax.f32 %v634, 0.0
        %v643 = vmax.f32 %v635, 0.0
        %v644 = vmax.f32 %v636, 0.0
        %v645 = vmax.f32 %v637, 0.0
        %v646 = vld [vmem:[%s214 + $0x3] sm:$0x1]
        %v647 = vld [vmem:[%s214 + $0x4] sm:$0x1]
        %v648 = vadd.f32 %v638, %v639
        %v649 = vadd.f32 %v648, %v640
        %v650 = vadd.f32 %v649, %v641
        %v651 = vadd.f32 %v650, %v642
        %v652 = vadd.f32 %v651, %v643
        %v653 = vadd.f32 %v652, %v644
        %v654 = vadd.f32 %v653, %v645
        %v655 = vrot.slane %v654, 4
        %v656 = vadd.f32 %v654, %v655
        %v657 = vrot.slane %v656, 2
        %v658 = vadd.f32 %v656, %v657
        %v659 = vrot.slane %v658, 1
        %v660 = vadd.f32 %v658, %v659
        %v661 = vmul.f32 %v660, %v569
        %v662 = vmul.f32 %v638, %v638
        %v663 = vmul.f32 %v639, %v639
        %v664 = vmul.f32 %v640, %v640
        %v665 = vmul.f32 %v641, %v641
        %v666 = vmul.f32 %v642, %v642
        %v667 = vmul.f32 %v643, %v643
        %v668 = vmul.f32 %v644, %v644
        %v669 = vmul.f32 %v645, %v645
        %v670 = vadd.f32 %v662, %v663
        %v671 = vadd.f32 %v670, %v664
        %v672 = vadd.f32 %v671, %v665
        %v673 = vadd.f32 %v672, %v666
        %v674 = vadd.f32 %v673, %v667
        %v675 = vadd.f32 %v674, %v668
        %v676 = vadd.f32 %v675, %v669
        %v677 = vrot.slane %v676, 4
        %v678 = vadd.f32 %v676, %v677
        %v679 = vrot.slane %v678, 2
        %v680 = vadd.f32 %v678, %v679
        %v681 = vrot.slane %v680, 1
        %v682 = vadd.f32 %v680, %v681
        %v683 = vmul.f32 %v682, %v569
        %v684 = vmul.f32 %v661, %v661
        %v685 = vsub.f32 %v683, %v684
        %v686 = vmax.f32 %v685, 0.0
        %v687 = vsub.f32 %v638, %v661
        %v688 = vsub.f32 %v639, %v661
        %v689 = vsub.f32 %v640, %v661
        %v690 = vsub.f32 %v641, %v661
        %v691 = vsub.f32 %v642, %v661
        %v692 = vsub.f32 %v643, %v661
        %v693 = vsub.f32 %v644, %v661
        %v694 = vsub.f32 %v645, %v661
        %v695 = vadd.f32 %v686, 1e-05
        %v696 = vrsqrt.pop %v695
        %v697 = vmul.f32 %v687, %v696
        %v698 = vmul.f32 %v688, %v696
        %v699 = vmul.f32 %v689, %v696
        %v700 = vmul.f32 %v690, %v696
        %v701 = vmul.f32 %v691, %v696
        %v702 = vmul.f32 %v692, %v696
        %v703 = vmul.f32 %v693, %v696
        %v704 = vmul.f32 %v694, %v696
        %v705 = vlaneseq
        %v706 = vshrl.u32 %v705, 7
        %v707 = vsub.s32 0, %v706
        %v708 = vrot.slane %v646, %v707
        %v709 = vmul.f32 %v697, %v708
        %v710 = vmul.f32 %v698, %v708
        %v711 = vmul.f32 %v699, %v708
        %v712 = vmul.f32 %v700, %v708
        %v713 = vmul.f32 %v701, %v708
        %v714 = vmul.f32 %v702, %v708
        %v715 = vmul.f32 %v703, %v708
        %v716 = vmul.f32 %v704, %v708
        %v717 = vlaneseq
        %v718 = vshrl.u32 %v717, 7
        %v719 = vsub.s32 0, %v718
        %v720 = vrot.slane %v647, %v719
        %v721 = vadd.f32 %v709, %v720
        %v722 = vadd.f32 %v710, %v720
        %v723 = vadd.f32 %v711, %v720
        %v724 = vadd.f32 %v712, %v720
        %v725 = vadd.f32 %v713, %v720
        %v726 = vadd.f32 %v714, %v720
        %v727 = vadd.f32 %v715, %v720
        %v728 = vadd.f32 %v716, %v720
        %v729 = vmax.f32 %v721, 0.0
        %v730 = vmax.f32 %v722, 0.0
        %v731 = vmax.f32 %v723, 0.0
        %v732 = vmax.f32 %v724, 0.0
        %v733 = vmax.f32 %v725, 0.0
        %v734 = vmax.f32 %v726, 0.0
        %v735 = vmax.f32 %v727, 0.0
        %v736 = vmax.f32 %v728, 0.0
        %737 = vst [vmem:[%s5] sm:$0xff] %v729
        %738 = vst [vmem:[%s5 + $0x8] sm:$0xff] %v730
        %739 = vst [vmem:[%s5 + $0x10] sm:$0xff] %v731
        %740 = vst [vmem:[%s5 + $0x18] sm:$0xff] %v732
        %741 = vst [vmem:[%s5 + $0x20] sm:$0xff] %v733
        %742 = vst [vmem:[%s5 + $0x28] sm:$0xff] %v734
        %743 = vst [vmem:[%s5 + $0x30] sm:$0xff] %v735
        %744 = vst [vmem:[%s5 + $0x38] sm:$0xff] %v736
        // Predicated region
        $region79: #{_encoder_pallas.1} parent=35 // pred_check
          %p745 = pneg %p124
        $region80: #{_encoder_pallas.1} parent=35 // pred_check_branch
          %747 = sbr.rel (%p745) target = $region82
        $region81: #{_encoder_pallas.1} parent=35 // pred_region
          _
        $region82: #{_encoder_pallas.1} parent=35 // pred_fallthru
          _
        // Predicated region
        $region83: #{_encoder_pallas.1} parent=35 // pred_check
          %p748 = pneg %p124
        $region84: #{_encoder_pallas.1} parent=35 // pred_check_branch
          %750 = sbr.rel (%p748) target = $region86
        $region85: #{_encoder_pallas.1} parent=35 // pred_region
          _
        $region86: #{_encoder_pallas.1} parent=35 // pred_fallthru
          _
      $region36: #{_encoder_pallas.1} parent=5 // pred_fallthru
        _
      %p751 = scmp.le.s32.totalorder 2, %s12
      // Predicated region
      $region87: #{_encoder_pallas.1} parent=5 // pred_check
        %p752 = pneg %p751
      $region88: #{_encoder_pallas.1} parent=5 // pred_check_branch
        %754 = sbr.rel (%p752) target = $region90
      $region89: #{_encoder_pallas.1} parent=5 // pred_region
        %s755 = ssub.s32 %s12, 2
      $region90: #{_encoder_pallas.1} parent=5 // pred_fallthru
        _
    $region6: #{_encoder_pallas.1} parent=1 // loop_footer
      %s16 = sadd.s32 1, %s12
    $region7: #{_encoder_pallas.1} parent=1 // loop_footer_branch
      %11 = sbr.rel target = $region3
    $region8: #{_encoder_pallas.1} parent=1 // loop_exit
      _
    %756 = vsyncpa [#allocation4], 1
    %s757 = scalar_lea.sflag [#allocation4], 1
    %758 = vsyncpa %s757, 1
  %759 = vsyncmov [#allocation2]
  %s760 = vpop.sfrf %759
  %p761 = scmp.eq.s32.totalorder %s760, 0
  %p762 = pneg %p761
  %764 = shalt.err (%p762)

</llo_original>
